<compile_context>
chip_gen: v5e
topology: v5e:2x2
jax: 0.10.0
libtpu: 0.0.40
codegen_flags: <defaults>
</compile_context>

<pallas_src>
import jax
import jax.numpy as jnp
import numpy as np
from jax.experimental import pallas as pl
from jax.experimental.pallas import tpu as pltpu


def _cross_vector_kernel(x_ref, w_ref, b_ref, o_ref):
    # x_ref: (B_TILE, F)   w_ref / b_ref: (L, F)   o_ref: (B_TILE, F)
    x0 = x_ref[...].astype(jnp.float32)
    w_all = w_ref[...].astype(jnp.float32)
    b_all = b_ref[...].astype(jnp.float32)
    num_layers = w_ref.shape[0]

    xl = x0
    for i in range(num_layers):                      # static unroll, L is tiny
        w = w_all[i:i + 1, :]                        # (1, F)
        b = b_all[i:i + 1, :]                        # (1, F)
        # <x_l, w_i> per batch row -> (B_TILE, 1)   (VPU mul + XLU lane reduce)
        xl_w = jnp.sum(xl * w, axis=-1, keepdims=True)
        xl = x0 * xl_w + b + xl
    o_ref[...] = xl.astype(o_ref.dtype)


def _cross_matrix_kernel(x_ref, wt_ref, b_ref, o_ref):
    # x_ref: (B_TILE, F)   wt_ref: (L, F, F) pre-transposed (W_i^T)
    # b_ref: (L, F)        o_ref: (B_TILE, F)
    x0 = x_ref[...].astype(jnp.float32)
    b_all = b_ref[...].astype(jnp.float32)
    num_layers = wt_ref.shape[0]

    xl = x0
    for i in range(num_layers):                      # static unroll
        wt = wt_ref[i].astype(jnp.float32)           # (F, F) = W_i^T
        # (W_i @ x_l) per row == x_l @ W_i^T -> MXU matmul, f32 accumulation
        xl_w = jnp.dot(xl, wt,
                       preferred_element_type=jnp.float32,
                       precision=jax.lax.Precision.HIGHEST)
        xl = x0 * (xl_w + b_all[i:i + 1, :]) + xl
    o_ref[...] = xl.astype(o_ref.dtype)


def cross_layer_forward(x, kernels, bias, cross_type="vector", batch_tile=512):
    """CrossLayer forward.

    x:       (B, F)
    kernels: (L, F, 1) for 'vector', (L, F, F) for 'matrix'
    bias:    (L, F, 1)
    returns  (B, F), same dtype as x.
    """
    B, F = x.shape
    L = bias.shape[0]
    b2d = bias[:, :, 0]                               # (L, F)

    if cross_type == "vector":
        w = kernels[:, :, 0]                          # (L, F)
        kernel_fn = _cross_vector_kernel
        w_spec = pl.BlockSpec((L, F), lambda i: (0, 0))          # resident
    elif cross_type == "matrix":
        w = jnp.transpose(kernels, (0, 2, 1))         # (L, F, F) = W^T per layer
        kernel_fn = _cross_matrix_kernel
        w_spec = pl.BlockSpec((L, F, F), lambda i: (0, 0, 0))    # resident
    else:
        raise ValueError(f"unknown cross_type: {cross_type}")

    # Batch tile: full batch if it is small, otherwise a large, 8-divisible
    # tile so the per-grid-step overhead is amortized and stores stay wide.
    if B <= batch_tile:
        bt = B
    else:
        assert batch_tile % 8 == 0, "batch_tile must be a multiple of 8"
        bt = batch_tile
    grid = (pl.cdiv(B, bt),)

    return pl.pallas_call(
        kernel_fn,
        out_shape=jax.ShapeDtypeStruct((B, F), x.dtype),
        grid=grid,
        in_specs=[
            pl.BlockSpec((bt, F), lambda i: (i, 0)),   # x: one batch tile/step
            w_spec,                                    # weights: constant block
            pl.BlockSpec((L, F), lambda i: (0, 0)),    # bias: constant block
        ],
        out_specs=pl.BlockSpec((bt, F), lambda i: (i, 0)),
        compiler_params=pltpu.CompilerParams(
            # Batch tiles are fully independent -> shard across v7x's 2 TCs.
            dimension_semantics=("parallel",),
            # Safe on all generations (v5e default is 16 MiB); raise further on
            # v6e if you push batch_tile into the thousands.
            vmem_limit_bytes=32 * 1024 * 1024,
        ),
    )(x, w, b2d)


def _reference(x, kernels, bias, cross_type):
    # Pure-JAX mirror of the PyTorch CrossLayer.forward.
    x0 = x[:, :, None]                                # (B, F, 1)
    xl = x0
    for i in range(bias.shape[0]):
        w = kernels[i]
        b = bias[i]
        if cross_type == "vector":
            xl_w = jnp.matmul(jnp.transpose(xl, (0, 2, 1)), w,
                              precision=jax.lax.Precision.HIGHEST)   # (B,1,1)
            x0_l = jnp.matmul(x0, xl_w,
                              precision=jax.lax.Precision.HIGHEST) + b
            xl = x0_l + xl
        else:  # matrix
            xl_w = jnp.matmul(w, xl,
                              precision=jax.lax.Precision.HIGHEST)   # (B,F,1)
            xl = x0 * (xl_w + b) + xl
    return xl[:, :, 0]


if __name__ == "__main__":
    key = jax.random.PRNGKey(0)
    B, F, L = 8, 32, 2
    k1, k2, k3, k4 = jax.random.split(key, 4)
    x = jax.random.normal(k1, (B, F), dtype=jnp.float32)
    kernels_vec = jax.random.normal(k2, (L, F, 1), dtype=jnp.float32) * 0.1
    kernels_mat = jax.random.normal(k3, (L, F, F), dtype=jnp.float32) * 0.1
    bias = jax.random.normal(k4, (L, F, 1), dtype=jnp.float32) * 0.1

    # cross_type='vector' (module default)
    out_v = jax.block_until_ready(
        cross_layer_forward(x, kernels_vec, bias, cross_type="vector"))
    ref_v = _reference(x, kernels_vec, bias, "vector")
    np.testing.assert_allclose(np.asarray(out_v), np.asarray(ref_v),
                               rtol=1e-4, atol=1e-4)

    # cross_type='matrix'
    out_m = jax.block_until_ready(
        cross_layer_forward(x, kernels_mat, bias, cross_type="matrix"))
    ref_m = _reference(x, kernels_mat, bias, "matrix")
    np.testing.assert_allclose(np.asarray(out_m), np.asarray(ref_m),
                               rtol=1e-4, atol=1e-4)

    print("KERNEL_OK")
</pallas_src>

<mosaic_0001>
module attributes {stable_mosaic.version = 11 : i64} {
  func.func @_cross_vector_kernel(%arg0: i32, %arg1: memref<8x32xf32, #tpu.memory_space<vmem>>, %arg2: memref<2x32xf32, #tpu.memory_space<vmem>>, %arg3: memref<2x32xf32, #tpu.memory_space<vmem>>, %arg4: memref<8x32xf32, #tpu.memory_space<vmem>>) attributes {dimension_semantics = [#tpu.dimension_semantics<parallel>], iteration_bounds = array<i64: 1>, scalar_prefetch = 0 : i64, scratch_operands = 0 : i64, tpu.core_type = #tpu.core_type<tc>, window_params = [{transform_indices = @transform_0, window_bounds = array<i64: 8, 32>}, {pipeline_mode = #tpu.pipeline_mode<synchronous>, transform_indices = @transform_1, window_bounds = array<i64: 2, 32>}, {pipeline_mode = #tpu.pipeline_mode<synchronous>, transform_indices = @transform_2, window_bounds = array<i64: 2, 32>}, {transform_indices = @transform_3, window_bounds = array<i64: 8, 32>}]} {
    %c0 = arith.constant 0 : index
    %c0_0 = arith.constant 0 : index
    %0 = vector.load %arg1[%c0, %c0_0] : memref<8x32xf32, #tpu.memory_space<vmem>>, vector<8x32xf32>
    %c0_1 = arith.constant 0 : index
    %c0_2 = arith.constant 0 : index
    %1 = vector.load %arg2[%c0_1, %c0_2] : memref<2x32xf32, #tpu.memory_space<vmem>>, vector<2x32xf32>
    %c0_3 = arith.constant 0 : index
    %c0_4 = arith.constant 0 : index
    %2 = vector.load %arg3[%c0_3, %c0_4] : memref<2x32xf32, #tpu.memory_space<vmem>>, vector<2x32xf32>
    %3 = vector.extract_strided_slice %1 {offsets = [0, 0], sizes = [1, 32], strides = [1, 1]} : vector<2x32xf32> to vector<1x32xf32>
    %4 = vector.extract_strided_slice %2 {offsets = [0, 0], sizes = [1, 32], strides = [1, 1]} : vector<2x32xf32> to vector<1x32xf32>
    %5 = vector.broadcast %3 : vector<1x32xf32> to vector<8x32xf32>
    %6 = arith.mulf %0, %5 : vector<8x32xf32>
    %cst = arith.constant dense<0.000000e+00> : vector<8xf32>
    %7 = vector.multi_reduction <add>, %6, %cst [1] : vector<8x32xf32> to vector<8xf32>
    %8 = vector.shape_cast %7 : vector<8xf32> to vector<8x1xf32>
    %9 = vector.broadcast %8 : vector<8x1xf32> to vector<8x32xf32>
    %10 = arith.mulf %0, %9 : vector<8x32xf32>
    %11 = vector.broadcast %4 : vector<1x32xf32> to vector<8x32xf32>
    %12 = arith.addf %10, %11 : vector<8x32xf32>
    %13 = arith.addf %12, %0 : vector<8x32xf32>
    %14 = vector.extract_strided_slice %1 {offsets = [1, 0], sizes = [1, 32], strides = [1, 1]} : vector<2x32xf32> to vector<1x32xf32>
    %15 = vector.extract_strided_slice %2 {offsets = [1, 0], sizes = [1, 32], strides = [1, 1]} : vector<2x32xf32> to vector<1x32xf32>
    %16 = vector.broadcast %14 : vector<1x32xf32> to vector<8x32xf32>
    %17 = arith.mulf %13, %16 : vector<8x32xf32>
    %cst_5 = arith.constant dense<0.000000e+00> : vector<8xf32>
    %18 = vector.multi_reduction <add>, %17, %cst_5 [1] : vector<8x32xf32> to vector<8xf32>
    %19 = vector.shape_cast %18 : vector<8xf32> to vector<8x1xf32>
    %20 = vector.broadcast %19 : vector<8x1xf32> to vector<8x32xf32>
    %21 = arith.mulf %0, %20 : vector<8x32xf32>
    %22 = vector.broadcast %15 : vector<1x32xf32> to vector<8x32xf32>
    %23 = arith.addf %21, %22 : vector<8x32xf32>
    %24 = arith.addf %23, %13 : vector<8x32xf32>
    %c0_6 = arith.constant 0 : index
    %c0_7 = arith.constant 0 : index
    %25 = vector.load %arg4[%c0_6, %c0_7] : memref<8x32xf32, #tpu.memory_space<vmem>>, vector<8x32xf32>
    tpu.vector_store %arg4[%c0_6, %c0_7], %24 {strides = array<i32>} : memref<8x32xf32, #tpu.memory_space<vmem>>, vector<8x32xf32>,
    return
  }
  func.func @transform_0(%arg0: i32) -> (i32, i32) {
    %c0_i32 = arith.constant 0 : i32
    %c0_i32_0 = arith.constant 0 : i32
    return %arg0, %c0_i32 : i32, i32
  }
  func.func @transform_1(%arg0: i32) -> (i32, i32) {
    %c0_i32 = arith.constant 0 : i32
    %c0_i32_0 = arith.constant 0 : i32
    %c0_i32_1 = arith.constant 0 : i32
    return %c0_i32, %c0_i32_0 : i32, i32
  }
  func.func @transform_2(%arg0: i32) -> (i32, i32) {
    %c0_i32 = arith.constant 0 : i32
    %c0_i32_0 = arith.constant 0 : i32
    %c0_i32_1 = arith.constant 0 : i32
    return %c0_i32, %c0_i32_0 : i32, i32
  }
  func.func @transform_3(%arg0: i32) -> (i32, i32) {
    %c0_i32 = arith.constant 0 : i32
    %c0_i32_0 = arith.constant 0 : i32
    return %arg0, %c0_i32 : i32, i32
  }
}

</mosaic_0001>

<llo_original>
// kernel: tpu_custom_call.1
$region0: #{tpu_custom_call.1}
  #allocation0 [shape = 'u32[]', space=smem, size = 0x4, offset = 0x4, fixed_abs, tag = 'smem constant byte address 0x4 - core index']
  #allocation1 [shape = 'u32[72,128]{1,0:T(1,128)}', space=vmem, size = 0x9000, scoped, tag = 'internal scratch']
  %s0 = inlined_call_operand.hbm [shape: f32[8,32], index: 0, kind: input, shape index: {}]
  %s1 = inlined_call_operand.hbm [shape: f32[2,32], index: 1, kind: input, shape index: {}]
  %s2 = inlined_call_operand.hbm [shape: f32[2,32], index: 2, kind: input, shape index: {}]
  %s3 = inlined_call_operand.hbm [shape: f32[8,32], index: 3, kind: output, shape index: {}]
  %s4 = sld [smem:[#allocation0]]
  $region34: #{tpu_custom_call.1} parent=0
    _
  %s6 = ssub.s32 1, %s4
  %s7 = scalar_select 0, %s6, %s4
  $region1: #{tpu_custom_call.1} parent=0
    #allocation2 [shape = 'u8[4096]{0}', space=vmem, size = 0x1000, scoped, tag = 'input window, operand 0, single buffered']
    #allocation3 [shape = 's32[1]{0}', space=sflag, size = 0x4, scoped, tag = 'scoped memory for tpu_custom_call.1']
    #allocation4 [shape = 's32[1]{0}', space=sflag, size = 0x4, scoped, tag = 'scoped memory for tpu_custom_call.1']
    #allocation5 [shape = 'u8[1024]{0}', space=vmem, size = 0x400, scoped, tag = 'input window, operand 1, single buffered']
    #allocation6 [shape = 's32[1]{0}', space=sflag, size = 0x4, scoped, tag = 'scoped memory for tpu_custom_call.1']
    #allocation7 [shape = 'u8[1024]{0}', space=vmem, size = 0x400, scoped, tag = 'input window, operand 2, single buffered']
    #allocation8 [shape = 'u8[4096]{0}', space=vmem, size = 0x1000, scoped, tag = 'output window, operand 0, single buffered']
    %8 = vsyncpa [#allocation3], 0
    %9 = vsyncpa [#allocation6], 0
    %10 = vsyncpa [#allocation4], 0
    // Predicated region
    $region2: #{tpu_custom_call.1} parent=1 // pred_check
      _
    $region3: #{tpu_custom_call.1} parent=1 // pred_check_branch
      %12 = sbr.rel (0) target = $region5
    $region4: #{tpu_custom_call.1} parent=1 // pred_region
      %14 = vsyncadd [#allocation3], 0
      %s16 = sshll.u32 %s0, 4
      %s17 = int_to_ptr.hbm [resolvable:$true] %s16
      %s18 = sshll.u32 [#allocation2], 4
      %s19 = int_to_ptr.vmem [resolvable:$true] %s18
      %21 = dma.hbm_to_vmem [thread:$0]  %s17, 128, %s19, [#allocation3]
    $region5: #{tpu_custom_call.1} parent=1 // pred_fallthru
      _
    // Predicated region
    $region6: #{tpu_custom_call.1} parent=1 // pred_check
      _
    $region7: #{tpu_custom_call.1} parent=1 // pred_check_branch
      %23 = sbr.rel (0) target = $region9
    $region8: #{tpu_custom_call.1} parent=1 // pred_region
      %25 = vsyncadd [#allocation6], 0
      %s27 = sshll.u32 %s1, 4
      %s28 = int_to_ptr.hbm [resolvable:$true] %s27
      %s29 = sshll.u32 [#allocation5], 4
      %s30 = int_to_ptr.vmem [resolvable:$true] %s29
      %32 = dma.hbm_to_vmem [thread:$0]  %s28, 32, %s30, [#allocation6]
    $region9: #{tpu_custom_call.1} parent=1 // pred_fallthru
      _
    // Predicated region
    $region10: #{tpu_custom_call.1} parent=1 // pred_check
      _
    $region11: #{tpu_custom_call.1} parent=1 // pred_check_branch
      %34 = sbr.rel (0) target = $region13
    $region12: #{tpu_custom_call.1} parent=1 // pred_region
      %36 = vsyncadd [#allocation6], 0
      %s38 = sshll.u32 %s2, 4
      %s39 = int_to_ptr.hbm [resolvable:$true] %s38
      %s40 = sshll.u32 [#allocation7], 4
      %s41 = int_to_ptr.vmem [resolvable:$true] %s40
      %43 = dma.hbm_to_vmem [thread:$0]  %s39, 32, %s41, [#allocation6]
    $region13: #{tpu_custom_call.1} parent=1 // pred_fallthru
      _
    // Predicated region
    $region14: #{tpu_custom_call.1} parent=1 // pred_check
      _
    $region15: #{tpu_custom_call.1} parent=1 // pred_check_branch
      %45 = sbr.rel (0) target = $region17
    $region16: #{tpu_custom_call.1} parent=1 // pred_region
      %47 = dma.done [#allocation3], 128
    $region17: #{tpu_custom_call.1} parent=1 // pred_fallthru
      _
    // Predicated region
    $region18: #{tpu_custom_call.1} parent=1 // pred_check
      _
    $region19: #{tpu_custom_call.1} parent=1 // pred_check_branch
      %49 = sbr.rel (0) target = $region21
    $region20: #{tpu_custom_call.1} parent=1 // pred_region
      %51 = dma.done [#allocation6], 32
    $region21: #{tpu_custom_call.1} parent=1 // pred_fallthru
      _
    // Predicated region
    $region22: #{tpu_custom_call.1} parent=1 // pred_check
      _
    $region23: #{tpu_custom_call.1} parent=1 // pred_check_branch
      %53 = sbr.rel (0) target = $region25
    $region24: #{tpu_custom_call.1} parent=1 // pred_region
      %55 = dma.done [#allocation6], 32
    $region25: #{tpu_custom_call.1} parent=1 // pred_fallthru
      _
    %v56 = vld [vmem:[#allocation2] sm:$0xff]
    %v57 = vld [vmem:[#allocation5] sm:$0x3]
    %v58 = vld [vmem:[#allocation7] sm:$0x3]
    %v59 = vperm.slane %v57, 0
    %v60 = vmul.f32 %v56, %v59
    %vm61 = vcmask 261120
    %v62 = vsel %vm61, %v60, 0.0
    %63 = vadd.xlane.f32.xlu0 %v62
    %v64 = vpop.xlane.xlu0 %63
    %v65 = vmul.f32 %v56, %v64
    %v66 = vperm.slane %v58, 0
    %v67 = vadd.f32 %v65, %v66
    %v68 = vadd.f32 %v67, %v56
    %v69 = vperm.slane %v57, 1
    %v70 = vmul.f32 %v68, %v69
    %v71 = vsel %vm61, %v70, 0.0
    %72 = vadd.xlane.f32.xlu0 %v71
    %v73 = vpop.xlane.xlu0 %72
    %v74 = vmul.f32 %v56, %v73
    %v75 = vperm.slane %v58, 1
    %v76 = vadd.f32 %v74, %v75
    %v77 = vadd.f32 %v76, %v68
    %78 = vst.msk [vmem:[#allocation8] sm:$0xff] %vm61, %v77
    // Predicated region
    $region26: #{tpu_custom_call.1} parent=1 // pred_check
      _
    $region27: #{tpu_custom_call.1} parent=1 // pred_check_branch
      %80 = sbr.rel (0) target = $region29
    $region28: #{tpu_custom_call.1} parent=1 // pred_region
      %82 = vsyncadd [#allocation4], 0
      %s84 = sshll.u32 [#allocation8], 4
      %s85 = int_to_ptr.vmem [resolvable:$true] %s84
      %s86 = sshll.u32 %s3, 4
      %s87 = int_to_ptr.hbm [resolvable:$true] %s86
      %89 = dma.vmem_to_hbm [thread:$0]  %s85, 128, %s87, [#allocation4]
    $region29: #{tpu_custom_call.1} parent=1 // pred_fallthru
      _
    // Predicated region
    $region30: #{tpu_custom_call.1} parent=1 // pred_check
      _
    $region31: #{tpu_custom_call.1} parent=1 // pred_check_branch
      %91 = sbr.rel (0) target = $region33
    $region32: #{tpu_custom_call.1} parent=1 // pred_region
      %93 = dma.done [#allocation4], 128
    $region33: #{tpu_custom_call.1} parent=1 // pred_fallthru
      _
    %94 = vsyncpa [#allocation3], 1
    %95 = vsyncpa [#allocation6], 1
    %96 = vsyncpa [#allocation4], 1

</llo_original>
